<compile_context>
chip_gen: v5e
topology: v5e:2x2
jax: 0.10.0
libtpu: 0.0.40
codegen_flags: <defaults>
</compile_context>

<pallas_src>
import functools

import jax
import jax.numpy as jnp
from jax.experimental import pallas as pl
from jax.experimental.pallas import tpu as pltpu


def _round_up(x, m):
    return ((x + m - 1) // m) * m


def _pick_lane_tile(d_pad, max_tile=512):
    """Largest multiple of 128 that divides d_pad and is <= max_tile."""
    t = max_tile
    while t >= 128:
        if d_pad % t == 0:
            return t
        t -= 128
    return 128


def _causal_conv_kernel(x_ref, w_ref, o_ref, *, kernel_size, seq_len):
    # x_ref: (1, K-1+L, TD)  -- time axis already left-padded with K-1 zero rows
    # w_ref: (K, TD)         -- per-channel taps; tap k multiplies x[t - (K-1) + k]
    # o_ref: (1, L, TD)
    w = w_ref[...]                                                      # (K, TD)
    acc = (x_ref[0, pl.ds(kernel_size - 1, seq_len), :]
           * w[kernel_size - 1:kernel_size, :])                         # current-step tap
    for k in range(kernel_size - 1):                                    # static unroll, K is small
        acc = acc + x_ref[0, pl.ds(k, seq_len), :] * w[k:k + 1, :]
    o_ref[0] = acc.astype(o_ref.dtype)


def causal_conv_smoothing(x, weight):
    """Depthwise causal 1D conv (groups == channels, no bias).

    x:      (B, L, D) float32  -- same layout as the PyTorch module's input
    weight: (D, K)    float32  -- PyTorch conv.weight[:, 0, :]
    returns (B, L, D) float32
    """
    b, seq_len, d_model = x.shape
    k = weight.shape[1]
    d_pad = _round_up(d_model, 128)
    tile_d = _pick_lane_tile(d_pad)

    # Lane-dense channel padding + causal left padding of the time axis, done once
    # in the wrapper so the kernel only does dense, unmasked vector work.
    x_p = jnp.pad(x.astype(jnp.float32),
                  ((0, 0), (k - 1, 0), (0, d_pad - d_model)))
    w_p = jnp.pad(weight.astype(jnp.float32).T, ((0, 0), (0, d_pad - d_model)))

    kernel = functools.partial(_causal_conv_kernel, kernel_size=k, seq_len=seq_len)

    out = pl.pallas_call(
        kernel,
        out_shape=jax.ShapeDtypeStruct((b, seq_len, d_pad), jnp.float32),
        grid_spec=pltpu.PrefetchScalarGridSpec(
            num_scalar_prefetch=0,
            grid=(b, d_pad // tile_d),
            in_specs=[
                pl.BlockSpec((1, seq_len + k - 1, tile_d), lambda i, j: (i, 0, j)),
                pl.BlockSpec((k, tile_d), lambda i, j: (0, j)),
            ],
            out_specs=pl.BlockSpec((1, seq_len, tile_d), lambda i, j: (i, 0, j)),
        ),
        compiler_params=pltpu.CompilerParams(
            dimension_semantics=("parallel", "parallel"),
            vmem_limit_bytes=32 * 1024 * 1024,
        ),
    )(x_p, w_p)
    return out[:, :, :d_model]


if __name__ == "__main__":
    batch, seq_len, d_model, kernel_size = 2, 16, 32, 3

    key = jax.random.PRNGKey(0)
    x = jax.random.normal(key, (batch, seq_len, d_model), jnp.float32)
    # Module init: depthwise conv weights filled with 1/kernel_size (causal moving average).
    weight = jnp.full((d_model, kernel_size), 1.0 / kernel_size, jnp.float32)

    out = causal_conv_smoothing(x, weight)
    jax.block_until_ready(out)

    # Pure-JAX reference of the same forward (Conv1d, groups=d_model, left pad K-1, no bias).
    xp = jnp.pad(x, ((0, 0), (kernel_size - 1, 0), (0, 0)))
    ref = jnp.zeros_like(x)
    for kk in range(kernel_size):
        ref = ref + xp[:, kk:kk + seq_len, :] * weight[:, kk][None, None, :]

    assert out.shape == (batch, seq_len, d_model)
    assert jnp.allclose(out, ref, atol=1e-5, rtol=1e-5)

    print("KERNEL_OK")
</pallas_src>

<mosaic_0001>
module attributes {stable_mosaic.version = 11 : i64} {
  func.func @_causal_conv_kernel(%arg0: i32, %arg1: i32, %arg2: memref<1x18x128xf32, #tpu.memory_space<vmem>>, %arg3: memref<3x128xf32, #tpu.memory_space<vmem>>, %arg4: memref<1x16x128xf32, #tpu.memory_space<vmem>>) attributes {dimension_semantics = [#tpu.dimension_semantics<parallel>, #tpu.dimension_semantics<parallel>], iteration_bounds = array<i64: 2, 1>, scalar_prefetch = 0 : i64, scratch_operands = 0 : i64, tpu.core_type = #tpu.core_type<tc>, window_params = [{transform_indices = @transform_0, window_bounds = array<i64: 1, 18, 128>}, {transform_indices = @transform_1, window_bounds = array<i64: 3, 128>}, {transform_indices = @transform_2, window_bounds = array<i64: 1, 16, 128>}]} {
    %c0 = arith.constant 0 : index
    %c0_0 = arith.constant 0 : index
    %0 = vector.load %arg3[%c0, %c0_0] : memref<3x128xf32, #tpu.memory_space<vmem>>, vector<3x128xf32>
    %c0_1 = arith.constant 0 : index
    %c2 = arith.constant 2 : index
    %c0_2 = arith.constant 0 : index
    %1 = vector.load %arg2[%c0_1, %c2, %c0_2] : memref<1x18x128xf32, #tpu.memory_space<vmem>>, vector<1x16x128xf32>
    %2 = vector.shape_cast %1 : vector<1x16x128xf32> to vector<16x128xf32>
    %3 = vector.extract_strided_slice %0 {offsets = [2, 0], sizes = [1, 128], strides = [1, 1]} : vector<3x128xf32> to vector<1x128xf32>
    %4 = vector.broadcast %3 : vector<1x128xf32> to vector<16x128xf32>
    %5 = arith.mulf %2, %4 : vector<16x128xf32>
    %c0_3 = arith.constant 0 : index
    %c0_4 = arith.constant 0 : index
    %c0_5 = arith.constant 0 : index
    %6 = vector.load %arg2[%c0_3, %c0_4, %c0_5] : memref<1x18x128xf32, #tpu.memory_space<vmem>>, vector<1x16x128xf32>
    %7 = vector.shape_cast %6 : vector<1x16x128xf32> to vector<16x128xf32>
    %8 = vector.extract_strided_slice %0 {offsets = [0, 0], sizes = [1, 128], strides = [1, 1]} : vector<3x128xf32> to vector<1x128xf32>
    %9 = vector.broadcast %8 : vector<1x128xf32> to vector<16x128xf32>
    %10 = arith.mulf %7, %9 : vector<16x128xf32>
    %11 = arith.addf %5, %10 : vector<16x128xf32>
    %c0_6 = arith.constant 0 : index
    %c1 = arith.constant 1 : index
    %c0_7 = arith.constant 0 : index
    %12 = vector.load %arg2[%c0_6, %c1, %c0_7] : memref<1x18x128xf32, #tpu.memory_space<vmem>>, vector<1x16x128xf32>
    %13 = vector.shape_cast %12 : vector<1x16x128xf32> to vector<16x128xf32>
    %14 = vector.extract_strided_slice %0 {offsets = [1, 0], sizes = [1, 128], strides = [1, 1]} : vector<3x128xf32> to vector<1x128xf32>
    %15 = vector.broadcast %14 : vector<1x128xf32> to vector<16x128xf32>
    %16 = arith.mulf %13, %15 : vector<16x128xf32>
    %17 = arith.addf %11, %16 : vector<16x128xf32>
    %c0_8 = arith.constant 0 : index
    %c0_9 = arith.constant 0 : index
    %c0_10 = arith.constant 0 : index
    %18 = vector.load %arg4[%c0_8, %c0_9, %c0_10] : memref<1x16x128xf32, #tpu.memory_space<vmem>>, vector<1x16x128xf32>
    %19 = vector.shape_cast %18 : vector<1x16x128xf32> to vector<16x128xf32>
    %20 = vector.shape_cast %17 : vector<16x128xf32> to vector<1x16x128xf32>
    tpu.vector_store %arg4[%c0_8, %c0_9, %c0_10], %20 {strides = array<i32>} : memref<1x16x128xf32, #tpu.memory_space<vmem>>, vector<1x16x128xf32>,
    return
  }
  func.func @transform_0(%arg0: i32, %arg1: i32) -> (i32, i32, i32) {
    %c0_i32 = arith.constant 0 : i32
    %c0_i32_0 = arith.constant 0 : i32
    return %arg0, %c0_i32, %arg1 : i32, i32, i32
  }
  func.func @transform_1(%arg0: i32, %arg1: i32) -> (i32, i32) {
    %c0_i32 = arith.constant 0 : i32
    %c0_i32_0 = arith.constant 0 : i32
    return %c0_i32, %arg1 : i32, i32
  }
  func.func @transform_2(%arg0: i32, %arg1: i32) -> (i32, i32, i32) {
    %c0_i32 = arith.constant 0 : i32
    %c0_i32_0 = arith.constant 0 : i32
    return %arg0, %c0_i32, %arg1 : i32, i32, i32
  }
}

</mosaic_0001>

<llo_original>
// kernel: tpu_custom_call.1
$region0: #{tpu_custom_call.1}
  #allocation0 [shape = 'u32[]', space=smem, size = 0x4, offset = 0x4, fixed_abs, tag = 'smem constant byte address 0x4 - core index']
  #allocation1 [shape = 'u32[72,128]{1,0:T(1,128)}', space=vmem, size = 0x9000, scoped, tag = 'internal scratch']
  %s0 = inlined_call_operand.vmem [shape: f32[2,18,128], index: 0, kind: input, shape index: {}]
  %s1 = inlined_call_operand.vmem [shape: f32[3,128], index: 1, kind: input, shape index: {}]
  %s2 = inlined_call_operand.hbm [shape: f32[2,16,128], index: 2, kind: output, shape index: {}]
  %s3 = sld [smem:[#allocation0]]
  $region41: #{tpu_custom_call.1} parent=0
    _
  %s5 = ssub.s32 1, %s3
  %s6 = scalar_select 0, %s5, %s3
  $region1: #{tpu_custom_call.1} parent=0
    #allocation2 [shape = 'u8[16384]{0}', space=vmem, size = 0x4000, scoped, tag = 'output window, operand 0']
    #allocation3 [shape = 's32[2]{0}', space=sflag, size = 0x8, scoped, tag = 'scoped memory for tpu_custom_call.1']
    %7 = vsyncpa [#allocation3], 0
    %s8 = scalar_lea.sflag [#allocation3], 1
    %9 = vsyncpa %s8, 0
    loop: start=0, step=1, limit=4
    $region2: #{tpu_custom_call.1} parent=1 // loop_pre_header
      _
    $region3: #{tpu_custom_call.1} parent=1 // loop_header
      %s11 = sphi 0, %s15
      %p12 = scmp.ge.s32.totalorder %s11, 4
      %s18 = sphi 0, %s30
      %s19 = sphi 0, %s26
      %s20 = sphi 0, %s18
      %s21 = sphi 0, %s19
      %s22 = sphi 0, %s20
      %s23 = sphi 0, %s21
      %s35 = sphi 0, %s37
      %s38 = sphi 0, %s35
      %s39 = sphi 0, %s38
      %s55 = sphi 0, %s39
      %s61 = sphi 0, %s63
      %s64 = sphi 0, %s61
      %s65 = sphi 0, %s64
      %s81 = sphi 0, %s65
      %s89 = sphi 0, %s91
      %s92 = sphi 0, %s89
      %s93 = sphi 0, %s92
      %s109 = sphi 0, %s93
    $region4: #{tpu_custom_call.1} parent=1 // loop_header_branch
      %14 = sbr.rel (%p12) target = $region8
    $region5: #{tpu_custom_call.1} parent=1 // loop_body
      %s16 = ssub.s32 %s11, 1
      %s17 = ssub.s32 %s11, 2
      %s24 = sadd.s32 1, %s19
      %p25 = scmp.ge.s32.totalorder %s24, 1
      %s26 = scalar_select %p25, 0, %s24
      %s27 = sadd.s32 1, %s18
      %s28 = scalar_select %p25, %s27, %s18
      %p29 = scmp.ge.s32.totalorder %s28, 2
      %s30 = scalar_select %p29, 0, %s28
      %s31 = ssub.s32 %s18, %s30
      %s32 = ssub.s32 %s19, %s26
      %s33 = sor.u32 %s31, %s32
      %p34 = scmp.eq.s32.totalorder %s33, 0
      %s36 = sadd.s32 %s35, 1
      %s37 = scalar_select %p34, %s35, %s36
      %p40 = pneg %p34
      %p41 = scmp.eq.s32.totalorder %s11, 1
      %p42 = por %p40, %p41
      %p43 = scmp.ne.s32.totalorder %s35, %s38
      %p44 = scmp.eq.s32.totalorder %s11, 0
      %p45 = por %p43, %p44
      %p46 = scmp.ne.s32.totalorder %s35, %s38
      %p47 = scmp.eq.s32.totalorder %s16, 1
      %p48 = por %p46, %p47
      %p49 = scmp.ne.s32.totalorder %s38, %s39
      %p50 = scmp.eq.s32.totalorder %s16, 0
      %p51 = por %p49, %p50
      %p52 = scmp.ne.s32.totalorder %s38, %s39
      %p53 = scmp.eq.s32.totalorder %s17, 1
      %p54 = por %p52, %p53
      %p56 = scmp.ne.s32.totalorder %s39, %s55
      %p57 = scmp.eq.s32.totalorder %s17, 0
      %p58 = por %p56, %p57
      %s59 = ssub.s32 %s19, %s26
      %p60 = scmp.eq.s32.totalorder %s59, 0
      %s62 = sadd.s32 %s61, 1
      %s63 = scalar_select %p60, %s61, %s62
      %p66 = pneg %p60
      %p67 = scmp.eq.s32.totalorder %s11, 1
      %p68 = por %p66, %p67
      %p69 = scmp.ne.s32.totalorder %s61, %s64
      %p70 = scmp.eq.s32.totalorder %s11, 0
      %p71 = por %p69, %p70
      %p72 = scmp.ne.s32.totalorder %s61, %s64
      %p73 = scmp.eq.s32.totalorder %s16, 1
      %p74 = por %p72, %p73
      %p75 = scmp.ne.s32.totalorder %s64, %s65
      %p76 = scmp.eq.s32.totalorder %s16, 0
      %p77 = por %p75, %p76
      %p78 = scmp.ne.s32.totalorder %s64, %s65
      %p79 = scmp.eq.s32.totalorder %s17, 1
      %p80 = por %p78, %p79
      %p82 = scmp.ne.s32.totalorder %s65, %s81
      %p83 = scmp.eq.s32.totalorder %s17, 0
      %p84 = por %p82, %p83
      %s85 = ssub.s32 %s18, %s30
      %s86 = ssub.s32 %s19, %s26
      %s87 = sor.u32 %s85, %s86
      %p88 = scmp.eq.s32.totalorder %s87, 0
      %s90 = sadd.s32 %s89, 1
      %s91 = scalar_select %p88, %s89, %s90
      %p94 = pneg %p88
      %p95 = scmp.eq.s32.totalorder %s11, 1
      %p96 = por %p94, %p95
      %p97 = scmp.ne.s32.totalorder %s89, %s92
      %p98 = scmp.eq.s32.totalorder %s11, 0
      %p99 = por %p97, %p98
      %p100 = scmp.ne.s32.totalorder %s89, %s92
      %p101 = scmp.eq.s32.totalorder %s16, 1
      %p102 = por %p100, %p101
      %p103 = scmp.ne.s32.totalorder %s92, %s93
      %p104 = scmp.eq.s32.totalorder %s16, 0
      %p105 = por %p103, %p104
      %p106 = scmp.ne.s32.totalorder %s92, %s93
      %p107 = scmp.eq.s32.totalorder %s17, 1
      %p108 = por %p106, %p107
      %p110 = scmp.ne.s32.totalorder %s93, %s109
      %p111 = scmp.eq.s32.totalorder %s17, 0
      %p112 = por %p110, %p111
      %p113 = scmp.le.s32.totalorder 1, %s11
      %p114 = scmp.lt.s32.totalorder %s11, 3
      %p115 = pnand %p113, %p114
      %p116 = pneg %p115
      // Predicated region
      $region9: #{tpu_custom_call.1} parent=5 // pred_check
        _
      $region10: #{tpu_custom_call.1} parent=5 // pred_check_branch
        %118 = sbr.rel (%p115) target = $region12
      $region11: #{tpu_custom_call.1} parent=5 // pred_region
        %s119 = ssub.s32 %s11, 1
        // Predicated region
        $region13: #{tpu_custom_call.1} parent=11 // pred_check
          %p120 = pneg %p77
        $region14: #{tpu_custom_call.1} parent=11 // pred_check_branch
          %122 = sbr.rel (%p120) target = $region16
        $region15: #{tpu_custom_call.1} parent=11 // pred_region
          %p123 = scmp.lt.s32.totalorder %s21, 0
          %s124 = scalar_select %p123, %s21, 0
          %s125 = smul.addr %s124, 4
          %s126 = scalar_lea.vmem %s1, %s125
        $region16: #{tpu_custom_call.1} parent=11 // pred_fallthru
          _
      $region12: #{tpu_custom_call.1} parent=5 // pred_fallthru
        _
      %p127 = scmp.lt.s32.totalorder %s11, 2
      // Predicated region
      $region17: #{tpu_custom_call.1} parent=5 // pred_check
        %p128 = pneg %p127
      $region18: #{tpu_custom_call.1} parent=5 // pred_check_branch
        %130 = sbr.rel (%p128) target = $region20
      $region19: #{tpu_custom_call.1} parent=5 // pred_region
        // Predicated region
        $region21: #{tpu_custom_call.1} parent=19 // pred_check
          %p131 = pneg %p45
        $region22: #{tpu_custom_call.1} parent=19 // pred_check_branch
          %133 = sbr.rel (%p131) target = $region24
        $region23: #{tpu_custom_call.1} parent=19 // pred_region
          %p134 = scmp.lt.s32.totalorder %s18, 1
          %s135 = scalar_select %p134, %s18, 1
          %p136 = scmp.lt.s32.totalorder %s19, 0
          %s137 = scalar_select %p136, %s19, 0
          %s138 = smul.addr %s135, 3
          %s139 = sadd.s32 %s137, %s138
          %s140 = smul.addr %s139, 8
          %s141 = scalar_lea.vmem %s0, %s140
        $region24: #{tpu_custom_call.1} parent=19 // pred_fallthru
          _
      $region20: #{tpu_custom_call.1} parent=5 // pred_fallthru
        _
      %p142 = scmp.le.s32.totalorder 1, %s11
      %p143 = scmp.lt.s32.totalorder %s11, 3
      %p144 = pnand %p142, %p143
      %p145 = pneg %p144
      // Predicated region
      $region25: #{tpu_custom_call.1} parent=5 // pred_check
        _
      $region26: #{tpu_custom_call.1} parent=5 // pred_check_branch
        %147 = sbr.rel (%p144) target = $region28
      $region27: #{tpu_custom_call.1} parent=5 // pred_region
        %s148 = ssub.s32 %s11, 1
        %p149 = scmp.lt.s32.totalorder %s20, 1
        %s150 = scalar_select %p149, %s20, 1
        %p151 = scmp.lt.s32.totalorder %s21, 0
        %s152 = scalar_select %p151, %s21, 0
        %s153 = smul.addr %s150, 3
        %s154 = sadd.s32 %s152, %s153
        %s155 = smul.addr %s154, 8
        %s156 = scalar_lea.vmem %s0, %s155
        %p157 = pneg %p51
        %p158 = pneg %p48
        %p159 = scmp.lt.s32.totalorder %s21, 0
        %s160 = scalar_select %p159, %s21, 0
        %s161 = smul.addr %s160, 4
        %s162 = scalar_lea.vmem %s1, %s161
        %p163 = pneg %p77
        %p164 = pneg %p74
        %p165 = pneg %p105
        %p166 = pneg %p102
        %s167 = sand.u32 %s92, 1
        %s168 = scalar_lea.sflag [#allocation3], %s167
        %s169 = sand.u32 %s92, 1
        %s170 = smul.addr %s169, 16
        %s171 = scalar_lea.vmem [#allocation2], %s170
        %p172 = scmp.lt.s32.totalorder %s20, 1
        %s173 = scalar_select %p172, %s20, 1
        %p174 = scmp.lt.s32.totalorder %s21, 0
        %s175 = scalar_select %p174, %s21, 0
        %s176 = smul.addr %s173, 3
        %s177 = sadd.s32 %s175, %s176
        %s178 = smul.addr %s177, 8
        %s179 = scalar_lea.vmem %s0, %s178
        %p180 = scmp.lt.s32.totalorder %s21, 0
        %s181 = scalar_select %p180, %s21, 0
        %s182 = smul.addr %s181, 4
        %s183 = scalar_lea.vmem %s1, %s182
        %v184 = vld [vmem:[%s183] sm:$0x7]
        %v185 = vld [vmem:[%s179 + $0x2] sm:$0xff]
        %v186 = vld [vmem:[%s179 + $0xa] sm:$0xff]
        %v187 = vperm.slane %v184, 2
        %v188 = vmul.f32 %v185, %v187
        %v189 = vmul.f32 %v186, %v187
        %v190 = vld [vmem:[%s179] sm:$0xff]
        %v191 = vld [vmem:[%s179 + $0x8] sm:$0xff]
        %v192 = vperm.slane %v184, 0
        %v193 = vmul.f32 %v190, %v192
        %v194 = vmul.f32 %v191, %v192
        %v195 = vadd.f32 %v188, %v193
        %v196 = vadd.f32 %v189, %v194
        %v197 = vld [vmem:[%s179 + $0x1] sm:$0xff]
        %v198 = vld [vmem:[%s179 + $0x9] sm:$0xff]
        %v199 = vperm.slane %v184, 1
        %v200 = vmul.f32 %v197, %v199
        %v201 = vmul.f32 %v198, %v199
        %v202 = vadd.f32 %v195, %v200
        %v203 = vadd.f32 %v196, %v201
        %204 = vst [vmem:[%s171] sm:$0xff] %v202
        %205 = vst [vmem:[%s171 + $0x8] sm:$0xff] %v203
        %s206 = sand.u32 %s92, 1
        %s207 = scalar_lea.sflag [#allocation3], %s206
        %s208 = sand.u32 %s92, 1
        %s209 = smul.addr %s208, 16
        %s210 = scalar_lea.vmem [#allocation2], %s209
        // Predicated region
        $region29: #{tpu_custom_call.1} parent=27 // pred_check
          %p211 = pneg %p102
        $region30: #{tpu_custom_call.1} parent=27 // pred_check_branch
          %213 = sbr.rel (%p211) target = $region32
        $region31: #{tpu_custom_call.1} parent=27 // pred_region
          %215 = vsyncadd %s207, 0
          %s216 = smul.addr %s20, 2
          %s217 = sadd.s32 %s21, %s216
          %s218 = smul.addr %s217, 8
          %s219 = scalar_lea.hbm %s2, %s218
          %s220 = sshll.u32 %s210, 4
          %s221 = int_to_ptr.vmem [resolvable:$true] %s220
          %s222 = sshll.u32 %s219, 4
          %s223 = int_to_ptr.hbm [resolvable:$true] %s222
          %228 = dma.vmem_to_hbm [thread:$0]  %s221, 256, %s223, %s207, 128, 128, 8
        $region32: #{tpu_custom_call.1} parent=27 // pred_fallthru
          _
      $region28: #{tpu_custom_call.1} parent=5 // pred_fallthru
        _
      %p229 = scmp.le.s32.totalorder 2, %s11
      // Predicated region
      $region33: #{tpu_custom_call.1} parent=5 // pred_check
        %p230 = pneg %p229
      $region34: #{tpu_custom_call.1} parent=5 // pred_check_branch
        %232 = sbr.rel (%p230) target = $region36
      $region35: #{tpu_custom_call.1} parent=5 // pred_region
        %s233 = ssub.s32 %s11, 2
        // Predicated region
        $region37: #{tpu_custom_call.1} parent=35 // pred_check
          %p234 = pneg %p108
        $region38: #{tpu_custom_call.1} parent=35 // pred_check_branch
          %236 = sbr.rel (%p234) target = $region40
        $region39: #{tpu_custom_call.1} parent=35 // pred_region
          %s237 = sand.u32 %s93, 1
          %s238 = scalar_lea.sflag [#allocation3], %s237
          %s239 = sand.u32 %s93, 1
          %s240 = smul.addr %s239, 16
          %s241 = scalar_lea.vmem [#allocation2], %s240
          %243 = dma.done %s238, 256
        $region40: #{tpu_custom_call.1} parent=35 // pred_fallthru
          _
      $region36: #{tpu_custom_call.1} parent=5 // pred_fallthru
        _
    $region6: #{tpu_custom_call.1} parent=1 // loop_footer
      %s15 = sadd.s32 1, %s11
    $region7: #{tpu_custom_call.1} parent=1 // loop_footer_branch
      %10 = sbr.rel target = $region3
    $region8: #{tpu_custom_call.1} parent=1 // loop_exit
      _
    %244 = vsyncpa [#allocation3], 1
    %s245 = scalar_lea.sflag [#allocation3], 1
    %246 = vsyncpa %s245, 1

</llo_original>
